<compile_context>
chip_gen: v5e
topology: v5e:2x2
jax: 0.10.0
libtpu: 0.0.40
codegen_flags: <defaults>
</compile_context>

<pallas_src>
import functools
import math

import jax
import jax.numpy as jnp
from jax.experimental import pallas as pl
from jax.experimental.pallas import tpu as pltpu

EPS = 1e-5                    # nn.LayerNorm default eps
NEG_BIAS = -1e30              # additive key-padding bias
VMEM_LIMIT = 56 * 1024 * 1024 # below v7x physical (64 MiB), above default scoped limits


def _layernorm(h, g, b):
    # h: (S, D) f32, g/b: (1, D) f32
    mu = jnp.mean(h, axis=-1, keepdims=True)
    var = jnp.mean((h - mu) ** 2, axis=-1, keepdims=True)
    return (h - mu) * jax.lax.rsqrt(var + EPS) * g + b


# ---------------------------------------------------------------------------
# Kernels
# ---------------------------------------------------------------------------
def input_fc_kernel(x_ref, w_ref, b_ref, o_ref):
    # embed_scale is pre-folded into w (host side); bf16 operands, f32 accumulation.
    xb = x_ref[0].astype(jnp.bfloat16)
    o_ref[0] = jnp.dot(xb, w_ref[...], preferred_element_type=jnp.float32) + b_ref[...]


def encoder_layer_kernel(*refs, n_head, ffn_chunk, fuse_final_ln):
    if fuse_final_ln:
        (x_ref, bias_ref,
         ln1g_ref, ln1b_ref,
         wq_ref, bq_ref, wk_ref, bk_ref, wv_ref, bv_ref, wo_ref, bo_ref,
         ln2g_ref, ln2b_ref, w1_ref, b1_ref, w2_ref, b2_ref,
         lnfg_ref, lnfb_ref, o_ref) = refs
    else:
        (x_ref, bias_ref,
         ln1g_ref, ln1b_ref,
         wq_ref, bq_ref, wk_ref, bk_ref, wv_ref, bv_ref, wo_ref, bo_ref,
         ln2g_ref, ln2b_ref, w1_ref, b1_ref, w2_ref, b2_ref,
         o_ref) = refs
        lnfg_ref = lnfb_ref = None

    x = x_ref[0]              # (S, D) f32 residual stream
    bias = bias_ref[0]        # (1, S) f32 additive key bias (0 = valid, -1e30 = padding)
    S, D = x.shape
    hd = D // n_head
    scaling = float(hd) ** -0.5

    # ---- self-attention sub-layer (pre-LN) ----
    h = _layernorm(x, ln1g_ref[...], ln1b_ref[...])
    hb = h.astype(jnp.bfloat16)
    q = jnp.dot(hb, wq_ref[...], preferred_element_type=jnp.float32) + bq_ref[...]
    k = jnp.dot(hb, wk_ref[...], preferred_element_type=jnp.float32) + bk_ref[...]
    v = jnp.dot(hb, wv_ref[...], preferred_element_type=jnp.float32) + bv_ref[...]
    q = q * scaling

    # head split -> (H, S, hd); batched contractions over all heads at once
    qh = jnp.stack([q[:, hh * hd:(hh + 1) * hd] for hh in range(n_head)], axis=0)
    kh = jnp.stack([k[:, hh * hd:(hh + 1) * hd] for hh in range(n_head)], axis=0)
    vh = jnp.stack([v[:, hh * hd:(hh + 1) * hd] for hh in range(n_head)], axis=0)
    qh = qh.astype(jnp.bfloat16)
    kh = kh.astype(jnp.bfloat16)
    vh = vh.astype(jnp.bfloat16)

    scores = jnp.einsum("hqd,hkd->hqk", qh, kh,
                        preferred_element_type=jnp.float32)       # (H, S, S) f32
    scores = scores + bias[None, :, :]                            # additive padding mask
    m = jnp.max(scores, axis=-1, keepdims=True)
    e = jnp.exp(scores - m)
    p = e * pl.reciprocal(jnp.sum(e, axis=-1, keepdims=True), approx=True)
    ctx = jnp.einsum("hqk,hkd->hqd", p.astype(jnp.bfloat16), vh,
                     preferred_element_type=jnp.float32)          # (H, S, hd) f32

    attn = jnp.concatenate([ctx[hh] for hh in range(n_head)], axis=-1)  # (S, D)
    attn = jnp.dot(attn.astype(jnp.bfloat16), wo_ref[...],
                   preferred_element_type=jnp.float32) + bo_ref[...]
    x = x + attn

    # ---- feed-forward sub-layer (pre-LN), chunked over dim_ff ----
    h2 = _layernorm(x, ln2g_ref[...], ln2b_ref[...]).astype(jnp.bfloat16)
    F = w1_ref.shape[1]
    cf = min(ffn_chunk, F)

    def ffn_piece(c0):
        c1 = min(c0 + cf, F)
        a = jnp.maximum(
            jnp.dot(h2, w1_ref[:, c0:c1], preferred_element_type=jnp.float32)
            + b1_ref[:, c0:c1], 0.0)
        return jnp.dot(a.astype(jnp.bfloat16), w2_ref[c0:c1, :],
                       preferred_element_type=jnp.float32)

    chunk_starts = list(range(0, F, cf))
    ffn = ffn_piece(chunk_starts[0])
    for c0 in chunk_starts[1:]:
        ffn = ffn + ffn_piece(c0)
    x = x + ffn + b2_ref[...]

    if fuse_final_ln:
        x = _layernorm(x, lnfg_ref[...], lnfb_ref[...])
    o_ref[0] = x


def final_ln_kernel(x_ref, g_ref, b_ref, o_ref):
    o_ref[0] = _layernorm(x_ref[0], g_ref[...], b_ref[...])


# ---------------------------------------------------------------------------
# Wrappers (pallas_call plumbing)
# ---------------------------------------------------------------------------
def _weight_spec(shape, single_buf):
    # Weight block index is constant across the batch grid -> single buffer is enough.
    if single_buf:
        return pl.BlockSpec(shape, lambda bb: (0, 0), pipeline_mode=pl.Buffered(1))
    return pl.BlockSpec(shape, lambda bb: (0, 0))


def run_input_fc(x_emb, w, b):
    B, S, E = x_emb.shape
    D = w.shape[1]

    def build(single_buf):
        return pl.pallas_call(
            input_fc_kernel,
            out_shape=jax.ShapeDtypeStruct((B, S, D), jnp.float32),
            grid=(B,),
            in_specs=[pl.BlockSpec((1, S, E), lambda bb: (bb, 0, 0)),
                      _weight_spec((E, D), single_buf),
                      _weight_spec((1, D), single_buf)],
            out_specs=pl.BlockSpec((1, S, D), lambda bb: (bb, 0, 0)),
            compiler_params=pltpu.CompilerParams(
                dimension_semantics=("parallel",),
                vmem_limit_bytes=VMEM_LIMIT),
        )

    try:
        return build(True)(x_emb, w, b)
    except Exception:  # pl.Buffered(1) unsupported in this JAX -> default double-buffering
        return build(False)(x_emb, w, b)


def run_encoder_layer(x, key_bias3, lp, n_head, *, ffn_chunk=512, final_ln=None):
    B, S, D = x.shape
    F = lp["w1"].shape[1]
    fuse = final_ln is not None

    args = [x, key_bias3,
            lp["ln1_g"], lp["ln1_b"],
            lp["wq"], lp["bq"], lp["wk"], lp["bk"], lp["wv"], lp["bv"],
            lp["wo"], lp["bo"],
            lp["ln2_g"], lp["ln2_b"],
            lp["w1"], lp["b1"], lp["w2"], lp["b2"]]
    if fuse:
        args += [final_ln[0], final_ln[1]]

    def build(single_buf):
        w = lambda shape: _weight_spec(shape, single_buf)
        in_specs = [
            pl.BlockSpec((1, S, D), lambda bb: (bb, 0, 0)),   # x
            pl.BlockSpec((1, 1, S), lambda bb: (bb, 0, 0)),   # additive key bias
            w((1, D)), w((1, D)),                             # ln1 g, b
            w((D, D)), w((1, D)),                             # wq, bq
            w((D, D)), w((1, D)),                             # wk, bk
            w((D, D)), w((1, D)),                             # wv, bv
            w((D, D)), w((1, D)),                             # wo, bo
            w((1, D)), w((1, D)),                             # ln2 g, b
            w((D, F)), w((1, F)),                             # ffn w1, b1
            w((F, D)), w((1, D)),                             # ffn w2, b2
        ]
        if fuse:
            in_specs += [w((1, D)), w((1, D))]                # final LN g, b
        return pl.pallas_call(
            functools.partial(encoder_layer_kernel, n_head=n_head,
                              ffn_chunk=ffn_chunk, fuse_final_ln=fuse),
            out_shape=jax.ShapeDtypeStruct((B, S, D), jnp.float32),
            grid=(B,),
            in_specs=in_specs,
            out_specs=pl.BlockSpec((1, S, D), lambda bb: (bb, 0, 0)),
            compiler_params=pltpu.CompilerParams(
                dimension_semantics=("parallel",),
                vmem_limit_bytes=VMEM_LIMIT),
        )

    try:
        return build(True)(*args)
    except Exception:  # pl.Buffered(1) unsupported in this JAX -> default double-buffering
        return build(False)(*args)


def run_final_ln(x, g, b):
    # Only used when num_layers == 0 (otherwise fused into the last layer kernel).
    B, S, D = x.shape
    return pl.pallas_call(
        final_ln_kernel,
        out_shape=jax.ShapeDtypeStruct((B, S, D), jnp.float32),
        grid=(B,),
        in_specs=[pl.BlockSpec((1, S, D), lambda bb: (bb, 0, 0)),
                  pl.BlockSpec((1, D), lambda bb: (0, 0)),
                  pl.BlockSpec((1, D), lambda bb: (0, 0))],
        out_specs=pl.BlockSpec((1, S, D), lambda bb: (bb, 0, 0)),
        compiler_params=pltpu.CompilerParams(
            dimension_semantics=("parallel",),
            vmem_limit_bytes=VMEM_LIMIT),
    )(x, g, b)


# ---------------------------------------------------------------------------
# Parameter construction (deterministic, synthetic).  Linear weights stored as
# [in_features, out_features] in bf16 so kernels compute x @ W + b on the MXU.
# ---------------------------------------------------------------------------
def make_params(key, vocab, embed_dim, d_model, n_head, dim_ff, num_layers):
    keys = iter(jax.random.split(key, 4 + num_layers * 6))

    def nrm(k, shape, scale=0.02, dtype=jnp.bfloat16):
        return (jax.random.normal(k, shape, dtype=jnp.float32) * scale).astype(dtype)

    params = {
        "embed": nrm(next(keys), (vocab, embed_dim), 1.0, jnp.float32),
        "fc_w": nrm(next(keys), (embed_dim, d_model)),
        "fc_b": jnp.zeros((1, d_model), jnp.float32),
        "ln_g": jnp.ones((1, d_model), jnp.float32),
        "ln_b": jnp.zeros((1, d_model), jnp.float32),
        "layers": [],
    }
    for _ in range(num_layers):
        lp = {
            "ln1_g": jnp.ones((1, d_model), jnp.float32),
            "ln1_b": jnp.zeros((1, d_model), jnp.float32),
            "wq": nrm(next(keys), (d_model, d_model)),
            "bq": jnp.zeros((1, d_model), jnp.float32),
            "wk": nrm(next(keys), (d_model, d_model)),
            "bk": jnp.zeros((1, d_model), jnp.float32),
            "wv": nrm(next(keys), (d_model, d_model)),
            "bv": jnp.zeros((1, d_model), jnp.float32),
            "wo": nrm(next(keys), (d_model, d_model)),
            "bo": jnp.zeros((1, d_model), jnp.float32),
            "ln2_g": jnp.ones((1, d_model), jnp.float32),
            "ln2_b": jnp.zeros((1, d_model), jnp.float32),
            "w1": nrm(next(keys), (d_model, dim_ff)),
            "b1": jnp.zeros((1, dim_ff), jnp.float32),
            "w2": nrm(next(keys), (dim_ff, d_model)),
            "b2": jnp.zeros((1, d_model), jnp.float32),
        }
        params["layers"].append(lp)
    return params


def transformer_encoder_forward(params, src, src_mask, *, d_model, n_head):
    # src: (B, S) int32 token ids; src_mask: (B, S), 0 = padding.
    embed_scale = math.sqrt(d_model)
    x = jnp.take(params["embed"], src, axis=0)                      # embedding lookup (glue)
    # Fold embed_scale into the input_fc weight once (host-side, tiny).
    fc_w = (params["fc_w"].astype(jnp.float32) * embed_scale).astype(params["fc_w"].dtype)
    x = run_input_fc(x, fc_w, params["fc_b"])
    B, S, _ = x.shape
    # Additive key-padding bias: 0 for valid tokens, -1e30 for padding.
    key_bias3 = ((src_mask.astype(jnp.float32) - 1.0) * (-NEG_BIAS * -1.0)).reshape(B, 1, S)
    key_bias3 = ((src_mask.astype(jnp.float32) - 1.0) * 1e30).reshape(B, 1, S)

    layers = params["layers"]
    n_layers = len(layers)
    if n_layers == 0:
        return run_final_ln(x, params["ln_g"], params["ln_b"])
    for li, lp in enumerate(layers):
        fln = (params["ln_g"], params["ln_b"]) if li == n_layers - 1 else None
        x = run_encoder_layer(x, key_bias3, lp, n_head, final_ln=fln)
    return x


# ---------------------------------------------------------------------------
if __name__ == "__main__":
    # Small, lane-friendly shapes consistent with the module.
    B, S = 2, 16
    vocab, embed_dim = 64, 64
    d_model, n_head, dim_ff, num_layers = 128, 4, 256, 2

    key = jax.random.PRNGKey(0)
    pkey, skey = jax.random.split(key)
    params = make_params(pkey, vocab, embed_dim, d_model, n_head, dim_ff, num_layers)

    src = jax.random.randint(skey, (B, S), 0, vocab, dtype=jnp.int32)
    src_lens = jnp.array([S, S - 5], dtype=jnp.int32)
    src_mask = (jnp.arange(S)[None, :] < src_lens[:, None]).astype(jnp.int32)  # (B, S)

    out = transformer_encoder_forward(params, src, src_mask,
                                      d_model=d_model, n_head=n_head)
    out = jax.block_until_ready(out)
    assert out.shape == (B, S, d_model)
    assert bool(jnp.all(jnp.isfinite(out)))
    print("KERNEL_OK")
</pallas_src>

<mosaic_0001>
module attributes {stable_mosaic.version = 11 : i64} {
  func.func @input_fc_kernel(%arg0: i32, %arg1: memref<1x16x64xf32, #tpu.memory_space<vmem>>, %arg2: memref<64x128xbf16, #tpu.memory_space<vmem>>, %arg3: memref<1x128xf32, #tpu.memory_space<vmem>>, %arg4: memref<1x16x128xf32, #tpu.memory_space<vmem>>) attributes {dimension_semantics = [#tpu.dimension_semantics<parallel>], iteration_bounds = array<i64: 2>, scalar_prefetch = 0 : i64, scratch_operands = 0 : i64, tpu.core_type = #tpu.core_type<tc>, window_params = [{transform_indices = @transform_0, window_bounds = array<i64: 1, 16, 64>}, {pipeline_mode = #tpu.pipeline_mode<synchronous>, transform_indices = @transform_1, window_bounds = array<i64: 64, 128>}, {pipeline_mode = #tpu.pipeline_mode<synchronous>, transform_indices = @transform_2, window_bounds = array<i64: 1, 128>}, {transform_indices = @transform_3, window_bounds = array<i64: 1, 16, 128>}]} {
    %c0 = arith.constant 0 : index
    %c0_0 = arith.constant 0 : index
    %c0_1 = arith.constant 0 : index
    %0 = vector.load %arg1[%c0, %c0_0, %c0_1] : memref<1x16x64xf32, #tpu.memory_space<vmem>>, vector<1x16x64xf32>
    %1 = vector.shape_cast %0 : vector<1x16x64xf32> to vector<16x64xf32>
    %2 = arith.truncf %1 : vector<16x64xf32> to vector<16x64xbf16>
    %c0_2 = arith.constant 0 : index
    %c0_3 = arith.constant 0 : index
    %3 = vector.load %arg2[%c0_2, %c0_3] : memref<64x128xbf16, #tpu.memory_space<vmem>>, vector<64x128xbf16>
    %cst = arith.constant dense<0.000000e+00> : vector<16x128xf32>
    %4 = tpu.matmul %2, %3, %cst {dimension_numbers = #tpu.dot_dimension_numbers<[1], [0], [0], [1], [0, 0, 1, 1], [], []>} : vector<16x64xbf16>, vector<64x128xbf16>, vector<16x128xf32> -> vector<16x128xf32>
    %c0_4 = arith.constant 0 : index
    %c0_5 = arith.constant 0 : index
    %5 = vector.load %arg3[%c0_4, %c0_5] : memref<1x128xf32, #tpu.memory_space<vmem>>, vector<1x128xf32>
    %6 = vector.broadcast %5 : vector<1x128xf32> to vector<16x128xf32>
    %7 = arith.addf %4, %6 : vector<16x128xf32>
    %c0_6 = arith.constant 0 : index
    %c0_7 = arith.constant 0 : index
    %c0_8 = arith.constant 0 : index
    %8 = vector.load %arg4[%c0_6, %c0_7, %c0_8] : memref<1x16x128xf32, #tpu.memory_space<vmem>>, vector<1x16x128xf32>
    %9 = vector.shape_cast %8 : vector<1x16x128xf32> to vector<16x128xf32>
    %10 = vector.shape_cast %7 : vector<16x128xf32> to vector<1x16x128xf32>
    tpu.vector_store %arg4[%c0_6, %c0_7, %c0_8], %10 {strides = array<i32>} : memref<1x16x128xf32, #tpu.memory_space<vmem>>, vector<1x16x128xf32>,
    return
  }
  func.func @transform_0(%arg0: i32) -> (i32, i32, i32) {
    %c0_i32 = arith.constant 0 : i32
    %c0_i32_0 = arith.constant 0 : i32
    %c0_i32_1 = arith.constant 0 : i32
    return %arg0, %c0_i32, %c0_i32_0 : i32, i32, i32
  }
  func.func @transform_1(%arg0: i32) -> (i32, i32) {
    %c0_i32 = arith.constant 0 : i32
    %c0_i32_0 = arith.constant 0 : i32
    %c0_i32_1 = arith.constant 0 : i32
    return %c0_i32, %c0_i32_0 : i32, i32
  }
  func.func @transform_2(%arg0: i32) -> (i32, i32) {
    %c0_i32 = arith.constant 0 : i32
    %c0_i32_0 = arith.constant 0 : i32
    %c0_i32_1 = arith.constant 0 : i32
    return %c0_i32, %c0_i32_0 : i32, i32
  }
  func.func @transform_3(%arg0: i32) -> (i32, i32, i32) {
    %c0_i32 = arith.constant 0 : i32
    %c0_i32_0 = arith.constant 0 : i32
    %c0_i32_1 = arith.constant 0 : i32
    return %arg0, %c0_i32, %c0_i32_0 : i32, i32, i32
  }
}

module attributes {stable_mosaic.version = 11 : i64} {
  func.func @input_fc_kernel(%arg0: i32, %arg1: memref<1x16x64xf32, #tpu.memory_space<vmem>>, %arg2: memref<64x128xbf16, #tpu.memory_space<vmem>>, %arg3: memref<1x128xf32, #tpu.memory_space<vmem>>, %arg4: memref<1x16x128xf32, #tpu.memory_space<vmem>>) attributes {dimension_semantics = [#tpu.dimension_semantics<parallel>], iteration_bounds = array<i64: 2>, scalar_prefetch = 0 : i64, scratch_operands = 0 : i64, tpu.core_type = #tpu.core_type<tc>, window_params = [{transform_indices = @transform_0, window_bounds = array<i64: 1, 16, 64>}, {pipeline_mode = #tpu.pipeline_mode<synchronous>, transform_indices = @transform_1, window_bounds = array<i64: 64, 128>}, {pipeline_mode = #tpu.pipeline_mode<synchronous>, transform_indices = @transform_2, window_bounds = array<i64: 1, 128>}, {transform_indices = @transform_3, window_bounds = array<i64: 1, 16, 128>}]} {
    %c0 = arith.constant 0 : index
    %c0_0 = arith.constant 0 : index
    %c0_1 = arith.constant 0 : index
    %0 = vector.load %arg1[%c0, %c0_0, %c0_1] : memref<1x16x64xf32, #tpu.memory_space<vmem>>, vector<1x16x64xf32>
    %1 = vector.shape_cast %0 : vector<1x16x64xf32> to vector<16x64xf32>
    %2 = arith.truncf %1 : vector<16x64xf32> to vector<16x64xbf16>
    %c0_2 = arith.constant 0 : index
    %c0_3 = arith.constant 0 : index
    %3 = vector.load %arg2[%c0_2, %c0_3] : memref<64x128xbf16, #tpu.memory_space<vmem>>, vector<64x128xbf16>
    %cst = arith.constant dense<0.000000e+00> : vector<16x128xf32>
    %4 = tpu.matmul %2, %3, %cst {dimension_numbers = #tpu.dot_dimension_numbers<[1], [0], [0], [1], [0, 0, 1, 1], [], []>} : vector<16x64xbf16>, vector<64x128xbf16>, vector<16x128xf32> -> vector<16x128xf32>
    %c0_4 = arith.constant 0 : index
    %c0_5 = arith.constant 0 : index
    %5 = vector.load %arg3[%c0_4, %c0_5] : memref<1x128xf32, #tpu.memory_space<vmem>>, vector<1x128xf32>
    %6 = vector.broadcast %5 : vector<1x128xf32> to vector<16x128xf32>
    %7 = arith.addf %4, %6 : vector<16x128xf32>
    %c0_6 = arith.constant 0 : index
    %c0_7 = arith.constant 0 : index
    %c0_8 = arith.constant 0 : index
    %8 = vector.load %arg4[%c0_6, %c0_7, %c0_8] : memref<1x16x128xf32, #tpu.memory_space<vmem>>, vector<1x16x128xf32>
    %9 = vector.shape_cast %8 : vector<1x16x128xf32> to vector<16x128xf32>
    %10 = vector.shape_cast %7 : vector<16x128xf32> to vector<1x16x128xf32>
    tpu.vector_store %arg4[%c0_6, %c0_7, %c0_8], %10 {strides = array<i32>} : memref<1x16x128xf32, #tpu.memory_space<vmem>>, vector<1x16x128xf32>,
    return
  }
  func.func @transform_0(%arg0: i32) -> (i32, i32, i32) {
    %c0_i32 = arith.constant 0 : i32
    %c0_i32_0 = arith.constant 0 : i32
    %c0_i32_1 = arith.constant 0 : i32
    return %arg0, %c0_i32, %c0_i32_0 : i32, i32, i32
  }
  func.func @transform_1(%arg0: i32) -> (i32, i32) {
    %c0_i32 = arith.constant 0 : i32
    %c0_i32_0 = arith.constant 0 : i32
    %c0_i32_1 = arith.constant 0 : i32
    return %c0_i32, %c0_i32_0 : i32, i32
  }
  func.func @transform_2(%arg0: i32) -> (i32, i32) {
    %c0_i32 = arith.constant 0 : i32
    %c0_i32_0 = arith.constant 0 : i32
    %c0_i32_1 = arith.constant 0 : i32
    return %c0_i32, %c0_i32_0 : i32, i32
  }
  func.func @transform_3(%arg0: i32) -> (i32, i32, i32) {
    %c0_i32 = arith.constant 0 : i32
    %c0_i32_0 = arith.constant 0 : i32
    %c0_i32_1 = arith.constant 0 : i32
    return %arg0, %c0_i32, %c0_i32_0 : i32, i32, i32
  }
}

</mosaic_0001>

<llo_original>
// kernel: tpu_custom_call.1
$region0: #{tpu_custom_call.1}
  #allocation0 [shape = 'u32[]', space=smem, size = 0x4, offset = 0x4, fixed_abs, tag = 'smem constant byte address 0x4 - core index']
  #allocation1 [shape = 'u32[72,128]{1,0:T(1,128)}', space=vmem, size = 0x9000, scoped, tag = 'internal scratch']
  %s0 = inlined_call_operand.hbm [shape: f32[2,16,64], index: 0, kind: input, shape index: {}]
  %s1 = inlined_call_operand.hbm [shape: bf16[64,128], index: 1, kind: input, shape index: {}]
  %s2 = inlined_call_operand.vmem [shape: f32[1,128], index: 2, kind: input, shape index: {}]
  %s3 = inlined_call_operand.hbm [shape: f32[2,16,128], index: 3, kind: output, shape index: {}]
  %s4 = sld [smem:[#allocation0]]
  $region53: #{tpu_custom_call.1} parent=0
    _
  %s6 = ssub.s32 1, %s4
  %s7 = scalar_select 0, %s6, %s4
  $region1: #{tpu_custom_call.1} parent=0
    #allocation2 [shape = 'u8[16384]{0}', space=vmem, size = 0x4000, scoped, tag = 'input window, operand 0']
    #allocation3 [shape = 's32[2]{0}', space=sflag, size = 0x8, scoped, tag = 'scoped memory for tpu_custom_call.1']
    #allocation4 [shape = 's32[2]{0}', space=sflag, size = 0x8, scoped, tag = 'scoped memory for tpu_custom_call.1']
    #allocation5 [shape = 'u8[16384]{0}', space=vmem, size = 0x4000, scoped, tag = 'input window, operand 1, single buffered']
    #allocation6 [shape = 's32[1]{0}', space=sflag, size = 0x4, scoped, tag = 'scoped memory for tpu_custom_call.1']
    #allocation7 [shape = 'u8[16384]{0}', space=vmem, size = 0x4000, scoped, tag = 'output window, operand 0']
    %8 = vsyncpa [#allocation3], 0
    %s9 = scalar_lea.sflag [#allocation3], 1
    %10 = vsyncpa %s9, 0
    %11 = vsyncpa [#allocation6], 0
    %12 = vsyncpa [#allocation4], 0
    %s13 = scalar_lea.sflag [#allocation4], 1
    %14 = vsyncpa %s13, 0
    loop: start=0, step=1, limit=4
    $region2: #{tpu_custom_call.1} parent=1 // loop_pre_header
      _
    $region3: #{tpu_custom_call.1} parent=1 // loop_header
      %s16 = sphi 0, %s20
      %p17 = scmp.ge.s32.totalorder %s16, 4
      %s26 = sphi 0, %s28
      %s29 = sphi 0, %s26
      %s30 = sphi 0, %s29
      %s46 = sphi 0, %s30
      %s50 = sphi 0, %s50
      %s52 = sphi 0, %s50
      %s53 = sphi 0, %s52
      %s67 = sphi 0, %s53
      %s71 = sphi 0, %s71
      %s73 = sphi 0, %s71
      %s74 = sphi 0, %s73
      %s88 = sphi 0, %s74
      %s94 = sphi 0, %s96
      %s97 = sphi 0, %s94
      %s98 = sphi 0, %s97
      %s114 = sphi 0, %s98
    $region4: #{tpu_custom_call.1} parent=1 // loop_header_branch
      %19 = sbr.rel (%p17) target = $region8
    $region5: #{tpu_custom_call.1} parent=1 // loop_body
      %s21 = ssub.s32 %s16, 1
      %s22 = ssub.s32 %s16, 2
      %s23 = sadd.s32 %s16, 1
      %s24 = ssub.s32 %s16, %s23
      %p25 = scmp.eq.s32.totalorder %s24, 0
      %s27 = sadd.s32 %s26, 1
      %s28 = scalar_select %p25, %s26, %s27
      %p31 = pneg %p25
      %p32 = scmp.eq.s32.totalorder %s16, 1
      %p33 = por %p31, %p32
      %p34 = scmp.ne.s32.totalorder %s26, %s29
      %p35 = scmp.eq.s32.totalorder %s16, 0
      %p36 = por %p34, %p35
      %p37 = scmp.ne.s32.totalorder %s26, %s29
      %p38 = scmp.eq.s32.totalorder %s21, 1
      %p39 = por %p37, %p38
      %p40 = scmp.ne.s32.totalorder %s29, %s30
      %p41 = scmp.eq.s32.totalorder %s21, 0
      %p42 = por %p40, %p41
      %p43 = scmp.ne.s32.totalorder %s29, %s30
      %p44 = scmp.eq.s32.totalorder %s22, 1
      %p45 = por %p43, %p44
      %p47 = scmp.ne.s32.totalorder %s30, %s46
      %p48 = scmp.eq.s32.totalorder %s22, 0
      %p49 = por %p47, %p48
      %s51 = sadd.s32 %s50, 1
      %p54 = scmp.eq.s32.totalorder %s16, 1
      %p55 = scmp.ne.s32.totalorder %s50, %s52
      %p56 = scmp.eq.s32.totalorder %s16, 0
      %p57 = por %p55, %p56
      %p58 = scmp.ne.s32.totalorder %s50, %s52
      %p59 = scmp.eq.s32.totalorder %s21, 1
      %p60 = por %p58, %p59
      %p61 = scmp.ne.s32.totalorder %s52, %s53
      %p62 = scmp.eq.s32.totalorder %s21, 0
      %p63 = por %p61, %p62
      %p64 = scmp.ne.s32.totalorder %s52, %s53
      %p65 = scmp.eq.s32.totalorder %s22, 1
      %p66 = por %p64, %p65
      %p68 = scmp.ne.s32.totalorder %s53, %s67
      %p69 = scmp.eq.s32.totalorder %s22, 0
      %p70 = por %p68, %p69
      %s72 = sadd.s32 %s71, 1
      %p75 = scmp.eq.s32.totalorder %s16, 1
      %p76 = scmp.ne.s32.totalorder %s71, %s73
      %p77 = scmp.eq.s32.totalorder %s16, 0
      %p78 = por %p76, %p77
      %p79 = scmp.ne.s32.totalorder %s71, %s73
      %p80 = scmp.eq.s32.totalorder %s21, 1
      %p81 = por %p79, %p80
      %p82 = scmp.ne.s32.totalorder %s73, %s74
      %p83 = scmp.eq.s32.totalorder %s21, 0
      %p84 = por %p82, %p83
      %p85 = scmp.ne.s32.totalorder %s73, %s74
      %p86 = scmp.eq.s32.totalorder %s22, 1
      %p87 = por %p85, %p86
      %p89 = scmp.ne.s32.totalorder %s74, %s88
      %p90 = scmp.eq.s32.totalorder %s22, 0
      %p91 = por %p89, %p90
      %s92 = ssub.s32 %s16, %s23
      %p93 = scmp.eq.s32.totalorder %s92, 0
      %s95 = sadd.s32 %s94, 1
      %s96 = scalar_select %p93, %s94, %s95
      %p99 = pneg %p93
      %p100 = scmp.eq.s32.totalorder %s16, 1
      %p101 = por %p99, %p100
      %p102 = scmp.ne.s32.totalorder %s94, %s97
      %p103 = scmp.eq.s32.totalorder %s16, 0
      %p104 = por %p102, %p103
      %p105 = scmp.ne.s32.totalorder %s94, %s97
      %p106 = scmp.eq.s32.totalorder %s21, 1
      %p107 = por %p105, %p106
      %p108 = scmp.ne.s32.totalorder %s97, %s98
      %p109 = scmp.eq.s32.totalorder %s21, 0
      %p110 = por %p108, %p109
      %p111 = scmp.ne.s32.totalorder %s97, %s98
      %p112 = scmp.eq.s32.totalorder %s22, 1
      %p113 = por %p111, %p112
      %p115 = scmp.ne.s32.totalorder %s98, %s114
      %p116 = scmp.eq.s32.totalorder %s22, 0
      %p117 = por %p115, %p116
      %p118 = scmp.le.s32.totalorder 1, %s16
      %p119 = scmp.lt.s32.totalorder %s16, 3
      %p120 = pnand %p118, %p119
      %p121 = pneg %p120
      // Predicated region
      $region9: #{tpu_custom_call.1} parent=5 // pred_check
        _
      $region10: #{tpu_custom_call.1} parent=5 // pred_check_branch
        %123 = sbr.rel (%p120) target = $region12
      $region11: #{tpu_custom_call.1} parent=5 // pred_region
        %s124 = ssub.s32 %s16, 1
        // Predicated region
        $region13: #{tpu_custom_call.1} parent=11 // pred_check
          %p125 = pneg %p63
        $region14: #{tpu_custom_call.1} parent=11 // pred_check_branch
          %127 = sbr.rel (%p125) target = $region16
        $region15: #{tpu_custom_call.1} parent=11 // pred_region
          %129 = vsyncadd [#allocation6], 0
          %s130 = sshll.u32 %s1, 4
          %s131 = int_to_ptr.hbm [resolvable:$true] %s130
          %s132 = sshll.u32 [#allocation5], 4
          %s133 = int_to_ptr.vmem [resolvable:$true] %s132
          %138 = dma.hbm_to_vmem [thread:$0]  %s131, 512, %s133, [#allocation6], 64, 64, 4
        $region16: #{tpu_custom_call.1} parent=11 // pred_fallthru
          _
        // Predicated region
        $region17: #{tpu_custom_call.1} parent=11 // pred_check
          %p139 = pneg %p84
        $region18: #{tpu_custom_call.1} parent=11 // pred_check_branch
          %141 = sbr.rel (%p139) target = $region20
        $region19: #{tpu_custom_call.1} parent=11 // pred_region
          _
        $region20: #{tpu_custom_call.1} parent=11 // pred_fallthru
          _
      $region12: #{tpu_custom_call.1} parent=5 // pred_fallthru
        _
      %p142 = scmp.lt.s32.totalorder %s16, 2
      // Predicated region
      $region21: #{tpu_custom_call.1} parent=5 // pred_check
        %p143 = pneg %p142
      $region22: #{tpu_custom_call.1} parent=5 // pred_check_branch
        %145 = sbr.rel (%p143) target = $region24
      $region23: #{tpu_custom_call.1} parent=5 // pred_region
        // Predicated region
        $region25: #{tpu_custom_call.1} parent=23 // pred_check
          %p146 = pneg %p36
        $region26: #{tpu_custom_call.1} parent=23 // pred_check_branch
          %148 = sbr.rel (%p146) target = $region28
        $region27: #{tpu_custom_call.1} parent=23 // pred_region
          %s149 = sand.u32 %s26, 1
          %s150 = scalar_lea.sflag [#allocation3], %s149
          %s151 = sand.u32 %s26, 1
          %s152 = smul.addr %s151, 16
          %s153 = scalar_lea.vmem [#allocation2], %s152
          %155 = vsyncadd %s150, 0
          %s156 = smul.addr %s16, 2
          %s157 = smul.addr %s156, 8
          %s158 = scalar_lea.hbm %s0, %s157
          %s159 = sshll.u32 %s158, 4
          %s160 = int_to_ptr.hbm [resolvable:$true] %s159
          %s161 = sshll.u32 %s153, 4
          %s162 = int_to_ptr.vmem [resolvable:$true] %s161
          %167 = dma.hbm_to_vmem [thread:$0]  %s160, 256, %s162, %s150, 128, 128, 8
        $region28: #{tpu_custom_call.1} parent=23 // pred_fallthru
          _
      $region24: #{tpu_custom_call.1} parent=5 // pred_fallthru
        _
      %p168 = scmp.le.s32.totalorder 1, %s16
      %p169 = scmp.lt.s32.totalorder %s16, 3
      %p170 = pnand %p168, %p169
      %p171 = pneg %p170
      // Predicated region
      $region29: #{tpu_custom_call.1} parent=5 // pred_check
        _
      $region30: #{tpu_custom_call.1} parent=5 // pred_check_branch
        %173 = sbr.rel (%p170) target = $region32
      $region31: #{tpu_custom_call.1} parent=5 // pred_region
        %s174 = ssub.s32 %s16, 1
        %s175 = sand.u32 %s29, 1
        %s176 = scalar_lea.sflag [#allocation3], %s175
        %s177 = sand.u32 %s29, 1
        %s178 = smul.addr %s177, 16
        %s179 = scalar_lea.vmem [#allocation2], %s178
        // Predicated region
        $region33: #{tpu_custom_call.1} parent=31 // pred_check
          %p180 = pneg %p42
        $region34: #{tpu_custom_call.1} parent=31 // pred_check_branch
          %182 = sbr.rel (%p180) target = $region36
        $region35: #{tpu_custom_call.1} parent=31 // pred_region
          %184 = dma.done %s176, 256
        $region36: #{tpu_custom_call.1} parent=31 // pred_fallthru
          _
        // Predicated region
        $region37: #{tpu_custom_call.1} parent=31 // pred_check
          %p185 = pneg %p63
        $region38: #{tpu_custom_call.1} parent=31 // pred_check_branch
          %187 = sbr.rel (%p185) target = $region40
        $region39: #{tpu_custom_call.1} parent=31 // pred_region
          %189 = dma.done [#allocation6], 512
        $region40: #{tpu_custom_call.1} parent=31 // pred_fallthru
          _
        %s190 = sand.u32 %s29, 1
        %s191 = scalar_lea.sflag [#allocation3], %s190
        %s192 = sand.u32 %s29, 1
        %s193 = smul.addr %s192, 16
        %s194 = scalar_lea.vmem [#allocation2], %s193
        %p195 = pneg %p42
        %p196 = pneg %p39
        %p197 = pneg %p63
        %p198 = pneg %p60
        %p199 = pneg %p84
        %p200 = pneg %p81
        %p201 = pneg %p110
        %p202 = pneg %p107
        %s203 = sand.u32 %s97, 1
        %s204 = scalar_lea.sflag [#allocation4], %s203
        %s205 = sand.u32 %s97, 1
        %s206 = smul.addr %s205, 16
        %s207 = scalar_lea.vmem [#allocation7], %s206
        %v209 = vld [vmem:[%s179] sm:$0xff]
        %v210 = vld [vmem:[%s179 + $0x8] sm:$0xff]
        %v211 = vpack.c.bf16 %v210, %v209
        %v212 = vld [vmem:[#allocation5] sm:$0xf]
        %v213 = vld [vmem:[#allocation5 + $0x4] sm:$0xf]
        %v214 = vld [vmem:[#allocation5 + $0x8] sm:$0xf]
        %v215 = vld [vmem:[#allocation5 + $0xc] sm:$0xf]
        %v216 = vld [vmem:[#allocation5 + $0x10] sm:$0xf]
        %v217 = vld [vmem:[#allocation5 + $0x14] sm:$0xf]
        %v218 = vld [vmem:[#allocation5 + $0x18] sm:$0xf]
        %v219 = vld [vmem:[#allocation5 + $0x1c] sm:$0xf]
        %v220 = vld [vmem:[%s2] sm:$0x1]
        %v222 = vperm.slane %v220, 0
        %v232 = vunpack.c.l.b16 %v212
        %v233 = vunpack.c.l.b16 %v213
        %v234 = vunpack.c.l.b16 %v214
        %v235 = vunpack.c.l.b16 %v215
        %v236 = vunpack.c.l.b16 %v216
        %v237 = vunpack.c.l.b16 %v217
        %v238 = vunpack.c.l.b16 %v218
        %v239 = vunpack.c.l.b16 %v219
        %v240 = vpack.c.b16 %v233, %v232
        %v241 = vpack.c.b16 %v235, %v234
        %v242 = vpack.c.b16 %v237, %v236
        %v243 = vpack.c.b16 %v239, %v238
        %vm248 = vcmask 523264
        %v250 = vsel %vm248, %v211, 0
        %252 = vmatpush.bf16.msra.mxu0 0
        %253 = vmatpush.bf16.msra.mxu0 0
        %254 = vmatpush.bf16.msra.mxu0 0
        %255 = vmatpush.bf16.msra.mxu0 0
        %256 = vmatpush.bf16.msra.mxu0 %v243
        %257 = vmatpush.bf16.msra.mxu0 %v242
        %258 = vmatpush.bf16.msra.mxu0 %v241
        %259 = vmatpush.bf16.msra.mxu0 %v240
        %260 = vmatmul.bf16.gmra.mxu0 %v250
        %v261 = vpop.f32.mrf.mxu0
        %v262 = vadd.f32 %v222, %v261
        %v263 = vpop.f32.mrf.mxu0
        %v264 = vadd.f32 %v222, %v263
        %265 = vdwg.mxu0
        %266 = vst [vmem:[%s207] sm:$0xff] %v262
        %267 = vst [vmem:[%s207 + $0x8] sm:$0xff] %v264
        %s268 = sand.u32 %s97, 1
        %s269 = scalar_lea.sflag [#allocation4], %s268
        %s270 = sand.u32 %s97, 1
        %s271 = smul.addr %s270, 16
        %s272 = scalar_lea.vmem [#allocation7], %s271
        // Predicated region
        $region41: #{tpu_custom_call.1} parent=31 // pred_check
          %p273 = pneg %p107
        $region42: #{tpu_custom_call.1} parent=31 // pred_check_branch
          %275 = sbr.rel (%p273) target = $region44
        $region43: #{tpu_custom_call.1} parent=31 // pred_region
          %277 = vsyncadd %s269, 0
          %s278 = smul.addr %s21, 2
          %s279 = smul.addr %s278, 8
          %s280 = scalar_lea.hbm %s3, %s279
          %s281 = sshll.u32 %s272, 4
          %s282 = int_to_ptr.vmem [resolvable:$true] %s281
          %s283 = sshll.u32 %s280, 4
          %s284 = int_to_ptr.hbm [resolvable:$true] %s283
          %289 = dma.vmem_to_hbm [thread:$0]  %s282, 256, %s284, %s269, 128, 128, 8
        $region44: #{tpu_custom_call.1} parent=31 // pred_fallthru
          _
      $region32: #{tpu_custom_call.1} parent=5 // pred_fallthru
        _
      %p290 = scmp.le.s32.totalorder 2, %s16
      // Predicated region
      $region45: #{tpu_custom_call.1} parent=5 // pred_check
        %p291 = pneg %p290
      $region46: #{tpu_custom_call.1} parent=5 // pred_check_branch
        %293 = sbr.rel (%p291) target = $region48
      $region47: #{tpu_custom_call.1} parent=5 // pred_region
        %s294 = ssub.s32 %s16, 2
        // Predicated region
        $region49: #{tpu_custom_call.1} parent=47 // pred_check
          %p295 = pneg %p113
        $region50: #{tpu_custom_call.1} parent=47 // pred_check_branch
          %297 = sbr.rel (%p295) target = $region52
        $region51: #{tpu_custom_call.1} parent=47 // pred_region
          %s298 = sand.u32 %s98, 1
          %s299 = scalar_lea.sflag [#allocation4], %s298
          %s300 = sand.u32 %s98, 1
          %s301 = smul.addr %s300, 16
          %s302 = scalar_lea.vmem [#allocation7], %s301
          %304 = dma.done %s299, 256
        $region52: #{tpu_custom_call.1} parent=47 // pred_fallthru
          _
      $region48: #{tpu_custom_call.1} parent=5 // pred_fallthru
        _
    $region6: #{tpu_custom_call.1} parent=1 // loop_footer
      %s20 = sadd.s32 1, %s16
    $region7: #{tpu_custom_call.1} parent=1 // loop_footer_branch
      %15 = sbr.rel target = $region3
    $region8: #{tpu_custom_call.1} parent=1 // loop_exit
      _
    %305 = vsyncpa [#allocation3], 1
    %s306 = scalar_lea.sflag [#allocation3], 1
    %307 = vsyncpa %s306, 1
    %308 = vsyncpa [#allocation6], 1
    %309 = vsyncpa [#allocation4], 1
    %s310 = scalar_lea.sflag [#allocation4], 1
    %311 = vsyncpa %s310, 1

// kernel: tpu_custom_call.1
$region0: #{tpu_custom_call.1}
  #allocation0 [shape = 'u32[]', space=smem, size = 0x4, offset = 0x4, fixed_abs, tag = 'smem constant byte address 0x4 - core index']
  #allocation1 [shape = 'u32[72,128]{1,0:T(1,128)}', space=vmem, size = 0x9000, scoped, tag = 'internal scratch']
  %s0 = inlined_call_operand.hbm [shape: f32[2,16,64], index: 0, kind: input, shape index: {}]
  %s1 = inlined_call_operand.hbm [shape: bf16[64,128], index: 1, kind: input, shape index: {}]
  %s2 = inlined_call_operand.vmem [shape: f32[1,128], index: 2, kind: input, shape index: {}]
  %s3 = inlined_call_operand.hbm [shape: f32[2,16,128], index: 3, kind: output, shape index: {}]
  %s4 = sld [smem:[#allocation0]]
  $region53: #{tpu_custom_call.1} parent=0
    _
  %s6 = ssub.s32 1, %s4
  %s7 = scalar_select 0, %s6, %s4
  $region1: #{tpu_custom_call.1} parent=0
    #allocation2 [shape = 'u8[16384]{0}', space=vmem, size = 0x4000, scoped, tag = 'input window, operand 0']
    #allocation3 [shape = 's32[2]{0}', space=sflag, size = 0x8, scoped, tag = 'scoped memory for tpu_custom_call.1']
    #allocation4 [shape = 's32[2]{0}', space=sflag, size = 0x8, scoped, tag = 'scoped memory for tpu_custom_call.1']
    #allocation5 [shape = 'u8[16384]{0}', space=vmem, size = 0x4000, scoped, tag = 'input window, operand 1, single buffered']
    #allocation6 [shape = 's32[1]{0}', space=sflag, size = 0x4, scoped, tag = 'scoped memory for tpu_custom_call.1']
    #allocation7 [shape = 'u8[16384]{0}', space=vmem, size = 0x4000, scoped, tag = 'output window, operand 0']
    %8 = vsyncpa [#allocation3], 0
    %s9 = scalar_lea.sflag [#allocation3], 1
    %10 = vsyncpa %s9, 0
    %11 = vsyncpa [#allocation6], 0
    %12 = vsyncpa [#allocation4], 0
    %s13 = scalar_lea.sflag [#allocation4], 1
    %14 = vsyncpa %s13, 0
    loop: start=0, step=1, limit=4
    $region2: #{tpu_custom_call.1} parent=1 // loop_pre_header
      _
    $region3: #{tpu_custom_call.1} parent=1 // loop_header
      %s16 = sphi 0, %s20
      %p17 = scmp.ge.s32.totalorder %s16, 4
      %s26 = sphi 0, %s28
      %s29 = sphi 0, %s26
      %s30 = sphi 0, %s29
      %s46 = sphi 0, %s30
      %s50 = sphi 0, %s50
      %s52 = sphi 0, %s50
      %s53 = sphi 0, %s52
      %s67 = sphi 0, %s53
      %s71 = sphi 0, %s71
      %s73 = sphi 0, %s71
      %s74 = sphi 0, %s73
      %s88 = sphi 0, %s74
      %s94 = sphi 0, %s96
      %s97 = sphi 0, %s94
      %s98 = sphi 0, %s97
      %s114 = sphi 0, %s98
    $region4: #{tpu_custom_call.1} parent=1 // loop_header_branch
      %19 = sbr.rel (%p17) target = $region8
    $region5: #{tpu_custom_call.1} parent=1 // loop_body
      %s21 = ssub.s32 %s16, 1
      %s22 = ssub.s32 %s16, 2
      %s23 = sadd.s32 %s16, 1
      %s24 = ssub.s32 %s16, %s23
      %p25 = scmp.eq.s32.totalorder %s24, 0
      %s27 = sadd.s32 %s26, 1
      %s28 = scalar_select %p25, %s26, %s27
      %p31 = pneg %p25
      %p32 = scmp.eq.s32.totalorder %s16, 1
      %p33 = por %p31, %p32
      %p34 = scmp.ne.s32.totalorder %s26, %s29
      %p35 = scmp.eq.s32.totalorder %s16, 0
      %p36 = por %p34, %p35
      %p37 = scmp.ne.s32.totalorder %s26, %s29
      %p38 = scmp.eq.s32.totalorder %s21, 1
      %p39 = por %p37, %p38
      %p40 = scmp.ne.s32.totalorder %s29, %s30
      %p41 = scmp.eq.s32.totalorder %s21, 0
      %p42 = por %p40, %p41
      %p43 = scmp.ne.s32.totalorder %s29, %s30
      %p44 = scmp.eq.s32.totalorder %s22, 1
      %p45 = por %p43, %p44
      %p47 = scmp.ne.s32.totalorder %s30, %s46
      %p48 = scmp.eq.s32.totalorder %s22, 0
      %p49 = por %p47, %p48
      %s51 = sadd.s32 %s50, 1
      %p54 = scmp.eq.s32.totalorder %s16, 1
      %p55 = scmp.ne.s32.totalorder %s50, %s52
      %p56 = scmp.eq.s32.totalorder %s16, 0
      %p57 = por %p55, %p56
      %p58 = scmp.ne.s32.totalorder %s50, %s52
      %p59 = scmp.eq.s32.totalorder %s21, 1
      %p60 = por %p58, %p59
      %p61 = scmp.ne.s32.totalorder %s52, %s53
      %p62 = scmp.eq.s32.totalorder %s21, 0
      %p63 = por %p61, %p62
      %p64 = scmp.ne.s32.totalorder %s52, %s53
      %p65 = scmp.eq.s32.totalorder %s22, 1
      %p66 = por %p64, %p65
      %p68 = scmp.ne.s32.totalorder %s53, %s67
      %p69 = scmp.eq.s32.totalorder %s22, 0
      %p70 = por %p68, %p69
      %s72 = sadd.s32 %s71, 1
      %p75 = scmp.eq.s32.totalorder %s16, 1
      %p76 = scmp.ne.s32.totalorder %s71, %s73
      %p77 = scmp.eq.s32.totalorder %s16, 0
      %p78 = por %p76, %p77
      %p79 = scmp.ne.s32.totalorder %s71, %s73
      %p80 = scmp.eq.s32.totalorder %s21, 1
      %p81 = por %p79, %p80
      %p82 = scmp.ne.s32.totalorder %s73, %s74
      %p83 = scmp.eq.s32.totalorder %s21, 0
      %p84 = por %p82, %p83
      %p85 = scmp.ne.s32.totalorder %s73, %s74
      %p86 = scmp.eq.s32.totalorder %s22, 1
      %p87 = por %p85, %p86
      %p89 = scmp.ne.s32.totalorder %s74, %s88
      %p90 = scmp.eq.s32.totalorder %s22, 0
      %p91 = por %p89, %p90
      %s92 = ssub.s32 %s16, %s23
      %p93 = scmp.eq.s32.totalorder %s92, 0
      %s95 = sadd.s32 %s94, 1
      %s96 = scalar_select %p93, %s94, %s95
      %p99 = pneg %p93
      %p100 = scmp.eq.s32.totalorder %s16, 1
      %p101 = por %p99, %p100
      %p102 = scmp.ne.s32.totalorder %s94, %s97
      %p103 = scmp.eq.s32.totalorder %s16, 0
      %p104 = por %p102, %p103
      %p105 = scmp.ne.s32.totalorder %s94, %s97
      %p106 = scmp.eq.s32.totalorder %s21, 1
      %p107 = por %p105, %p106
      %p108 = scmp.ne.s32.totalorder %s97, %s98
      %p109 = scmp.eq.s32.totalorder %s21, 0
      %p110 = por %p108, %p109
      %p111 = scmp.ne.s32.totalorder %s97, %s98
      %p112 = scmp.eq.s32.totalorder %s22, 1
      %p113 = por %p111, %p112
      %p115 = scmp.ne.s32.totalorder %s98, %s114
      %p116 = scmp.eq.s32.totalorder %s22, 0
      %p117 = por %p115, %p116
      %p118 = scmp.le.s32.totalorder 1, %s16
      %p119 = scmp.lt.s32.totalorder %s16, 3
      %p120 = pnand %p118, %p119
      %p121 = pneg %p120
      // Predicated region
      $region9: #{tpu_custom_call.1} parent=5 // pred_check
        _
      $region10: #{tpu_custom_call.1} parent=5 // pred_check_branch
        %123 = sbr.rel (%p120) target = $region12
      $region11: #{tpu_custom_call.1} parent=5 // pred_region
        %s124 = ssub.s32 %s16, 1
        // Predicated region
        $region13: #{tpu_custom_call.1} parent=11 // pred_check
          %p125 = pneg %p63
        $region14: #{tpu_custom_call.1} parent=11 // pred_check_branch
          %127 = sbr.rel (%p125) target = $region16
        $region15: #{tpu_custom_call.1} parent=11 // pred_region
          %129 = vsyncadd [#allocation6], 0
          %s130 = sshll.u32 %s1, 4
          %s131 = int_to_ptr.hbm [resolvable:$true] %s130
          %s132 = sshll.u32 [#allocation5], 4
          %s133 = int_to_ptr.vmem [resolvable:$true] %s132
          %138 = dma.hbm_to_vmem [thread:$0]  %s131, 512, %s133, [#allocation6], 64, 64, 4
        $region16: #{tpu_custom_call.1} parent=11 // pred_fallthru
          _
        // Predicated region
        $region17: #{tpu_custom_call.1} parent=11 // pred_check
          %p139 = pneg %p84
        $region18: #{tpu_custom_call.1} parent=11 // pred_check_branch
          %141 = sbr.rel (%p139) target = $region20
        $region19: #{tpu_custom_call.1} parent=11 // pred_region
          _
        $region20: #{tpu_custom_call.1} parent=11 // pred_fallthru
          _
      $region12: #{tpu_custom_call.1} parent=5 // pred_fallthru
        _
      %p142 = scmp.lt.s32.totalorder %s16, 2
      // Predicated region
      $region21: #{tpu_custom_call.1} parent=5 // pred_check
        %p143 = pneg %p142
      $region22: #{tpu_custom_call.1} parent=5 // pred_check_branch
        %145 = sbr.rel (%p143) target = $region24
      $region23: #{tpu_custom_call.1} parent=5 // pred_region
        // Predicated region
        $region25: #{tpu_custom_call.1} parent=23 // pred_check
          %p146 = pneg %p36
        $region26: #{tpu_custom_call.1} parent=23 // pred_check_branch
          %148 = sbr.rel (%p146) target = $region28
        $region27: #{tpu_custom_call.1} parent=23 // pred_region
          %s149 = sand.u32 %s26, 1
          %s150 = scalar_lea.sflag [#allocation3], %s149
          %s151 = sand.u32 %s26, 1
          %s152 = smul.addr %s151, 16
          %s153 = scalar_lea.vmem [#allocation2], %s152
          %155 = vsyncadd %s150, 0
          %s156 = smul.addr %s16, 2
          %s157 = smul.addr %s156, 8
          %s158 = scalar_lea.hbm %s0, %s157
          %s159 = sshll.u32 %s158, 4
          %s160 = int_to_ptr.hbm [resolvable:$true] %s159
          %s161 = sshll.u32 %s153, 4
          %s162 = int_to_ptr.vmem [resolvable:$true] %s161
          %167 = dma.hbm_to_vmem [thread:$0]  %s160, 256, %s162, %s150, 128, 128, 8
        $region28: #{tpu_custom_call.1} parent=23 // pred_fallthru
          _
      $region24: #{tpu_custom_call.1} parent=5 // pred_fallthru
        _
      %p168 = scmp.le.s32.totalorder 1, %s16
      %p169 = scmp.lt.s32.totalorder %s16, 3
      %p170 = pnand %p168, %p169
      %p171 = pneg %p170
      // Predicated region
      $region29: #{tpu_custom_call.1} parent=5 // pred_check
        _
      $region30: #{tpu_custom_call.1} parent=5 // pred_check_branch
        %173 = sbr.rel (%p170) target = $region32
      $region31: #{tpu_custom_call.1} parent=5 // pred_region
        %s174 = ssub.s32 %s16, 1
        %s175 = sand.u32 %s29, 1
        %s176 = scalar_lea.sflag [#allocation3], %s175
        %s177 = sand.u32 %s29, 1
        %s178 = smul.addr %s177, 16
        %s179 = scalar_lea.vmem [#allocation2], %s178
        // Predicated region
        $region33: #{tpu_custom_call.1} parent=31 // pred_check
          %p180 = pneg %p42
        $region34: #{tpu_custom_call.1} parent=31 // pred_check_branch
          %182 = sbr.rel (%p180) target = $region36
        $region35: #{tpu_custom_call.1} parent=31 // pred_region
          %184 = dma.done %s176, 256
        $region36: #{tpu_custom_call.1} parent=31 // pred_fallthru
          _
        // Predicated region
        $region37: #{tpu_custom_call.1} parent=31 // pred_check
          %p185 = pneg %p63
        $region38: #{tpu_custom_call.1} parent=31 // pred_check_branch
          %187 = sbr.rel (%p185) target = $region40
        $region39: #{tpu_custom_call.1} parent=31 // pred_region
          %189 = dma.done [#allocation6], 512
        $region40: #{tpu_custom_call.1} parent=31 // pred_fallthru
          _
        %s190 = sand.u32 %s29, 1
        %s191 = scalar_lea.sflag [#allocation3], %s190
        %s192 = sand.u32 %s29, 1
        %s193 = smul.addr %s192, 16
        %s194 = scalar_lea.vmem [#allocation2], %s193
        %p195 = pneg %p42
        %p196 = pneg %p39
        %p197 = pneg %p63
        %p198 = pneg %p60
        %p199 = pneg %p84
        %p200 = pneg %p81
        %p201 = pneg %p110
        %p202 = pneg %p107
        %s203 = sand.u32 %s97, 1
        %s204 = scalar_lea.sflag [#allocation4], %s203
        %s205 = sand.u32 %s97, 1
        %s206 = smul.addr %s205, 16
        %s207 = scalar_lea.vmem [#allocation7], %s206
        %v209 = vld [vmem:[%s179] sm:$0xff]
        %v210 = vld [vmem:[%s179 + $0x8] sm:$0xff]
        %v211 = vpack.c.bf16 %v210, %v209
        %v212 = vld [vmem:[#allocation5] sm:$0xf]
        %v213 = vld [vmem:[#allocation5 + $0x4] sm:$0xf]
        %v214 = vld [vmem:[#allocation5 + $0x8] sm:$0xf]
        %v215 = vld [vmem:[#allocation5 + $0xc] sm:$0xf]
        %v216 = vld [vmem:[#allocation5 + $0x10] sm:$0xf]
        %v217 = vld [vmem:[#allocation5 + $0x14] sm:$0xf]
        %v218 = vld [vmem:[#allocation5 + $0x18] sm:$0xf]
        %v219 = vld [vmem:[#allocation5 + $0x1c] sm:$0xf]
        %v220 = vld [vmem:[%s2] sm:$0x1]
        %v222 = vperm.slane %v220, 0
        %v232 = vunpack.c.l.b16 %v212
        %v233 = vunpack.c.l.b16 %v213
        %v234 = vunpack.c.l.b16 %v214
        %v235 = vunpack.c.l.b16 %v215
        %v236 = vunpack.c.l.b16 %v216
        %v237 = vunpack.c.l.b16 %v217
        %v238 = vunpack.c.l.b16 %v218
        %v239 = vunpack.c.l.b16 %v219
        %v240 = vpack.c.b16 %v233, %v232
        %v241 = vpack.c.b16 %v235, %v234
        %v242 = vpack.c.b16 %v237, %v236
        %v243 = vpack.c.b16 %v239, %v238
        %vm248 = vcmask 523264
        %v250 = vsel %vm248, %v211, 0
        %252 = vmatpush.bf16.msra.mxu0 0
        %253 = vmatpush.bf16.msra.mxu0 0
        %254 = vmatpush.bf16.msra.mxu0 0
        %255 = vmatpush.bf16.msra.mxu0 0
        %256 = vmatpush.bf16.msra.mxu0 %v243
        %257 = vmatpush.bf16.msra.mxu0 %v242
        %258 = vmatpush.bf16.msra.mxu0 %v241
        %259 = vmatpush.bf16.msra.mxu0 %v240
        %260 = vmatmul.bf16.gmra.mxu0 %v250
        %v261 = vpop.f32.mrf.mxu0
        %v262 = vadd.f32 %v222, %v261
        %v263 = vpop.f32.mrf.mxu0
        %v264 = vadd.f32 %v222, %v263
        %265 = vdwg.mxu0
        %266 = vst [vmem:[%s207] sm:$0xff] %v262
        %267 = vst [vmem:[%s207 + $0x8] sm:$0xff] %v264
        %s268 = sand.u32 %s97, 1
        %s269 = scalar_lea.sflag [#allocation4], %s268
        %s270 = sand.u32 %s97, 1
        %s271 = smul.addr %s270, 16
        %s272 = scalar_lea.vmem [#allocation7], %s271
        // Predicated region
        $region41: #{tpu_custom_call.1} parent=31 // pred_check
          %p273 = pneg %p107
        $region42: #{tpu_custom_call.1} parent=31 // pred_check_branch
          %275 = sbr.rel (%p273) target = $region44
        $region43: #{tpu_custom_call.1} parent=31 // pred_region
          %277 = vsyncadd %s269, 0
          %s278 = smul.addr %s21, 2
          %s279 = smul.addr %s278, 8
          %s280 = scalar_lea.hbm %s3, %s279
          %s281 = sshll.u32 %s272, 4
          %s282 = int_to_ptr.vmem [resolvable:$true] %s281
          %s283 = sshll.u32 %s280, 4
          %s284 = int_to_ptr.hbm [resolvable:$true] %s283
          %289 = dma.vmem_to_hbm [thread:$0]  %s282, 256, %s284, %s269, 128, 128, 8
        $region44: #{tpu_custom_call.1} parent=31 // pred_fallthru
          _
      $region32: #{tpu_custom_call.1} parent=5 // pred_fallthru
        _
      %p290 = scmp.le.s32.totalorder 2, %s16
      // Predicated region
      $region45: #{tpu_custom_call.1} parent=5 // pred_check
        %p291 = pneg %p290
      $region46: #{tpu_custom_call.1} parent=5 // pred_check_branch
        %293 = sbr.rel (%p291) target = $region48
      $region47: #{tpu_custom_call.1} parent=5 // pred_region
        %s294 = ssub.s32 %s16, 2
        // Predicated region
        $region49: #{tpu_custom_call.1} parent=47 // pred_check
          %p295 = pneg %p113
        $region50: #{tpu_custom_call.1} parent=47 // pred_check_branch
          %297 = sbr.rel (%p295) target = $region52
        $region51: #{tpu_custom_call.1} parent=47 // pred_region
          %s298 = sand.u32 %s98, 1
          %s299 = scalar_lea.sflag [#allocation4], %s298
          %s300 = sand.u32 %s98, 1
          %s301 = smul.addr %s300, 16
          %s302 = scalar_lea.vmem [#allocation7], %s301
          %304 = dma.done %s299, 256
        $region52: #{tpu_custom_call.1} parent=47 // pred_fallthru
          _
      $region48: #{tpu_custom_call.1} parent=5 // pred_fallthru
        _
    $region6: #{tpu_custom_call.1} parent=1 // loop_footer
      %s20 = sadd.s32 1, %s16
    $region7: #{tpu_custom_call.1} parent=1 // loop_footer_branch
      %15 = sbr.rel target = $region3
    $region8: #{tpu_custom_call.1} parent=1 // loop_exit
      _
    %305 = vsyncpa [#allocation3], 1
    %s306 = scalar_lea.sflag [#allocation3], 1
    %307 = vsyncpa %s306, 1
    %308 = vsyncpa [#allocation6], 1
    %309 = vsyncpa [#allocation4], 1
    %s310 = scalar_lea.sflag [#allocation4], 1
    %311 = vsyncpa %s310, 1

</llo_original>
